<compile_context>
chip_gen: v7x
topology: tpu7x:2x2x1
jax: 0.10.0
libtpu: 0.0.40
codegen_flags: <defaults>
</compile_context>

<pallas_src>
import functools
import math

import jax
import jax.numpy as jnp
from jax.experimental import pallas as pl
from jax.experimental.pallas import tpu as pltpu


# ---------------------------------------------------------------------------
# Kernel 1: dense / linear projection  y = x @ W^T + b   (M-tiled, pipelined)
# ---------------------------------------------------------------------------
def _linear_kernel(x_ref, w_ref, b_ref, o_ref):
    # x_ref: (TM, E), w_ref: (D, E)  (nn.Linear layout, no transpose),
    # b_ref: (1, D), o_ref: (TM, D)
    y = jax.lax.dot_general(
        x_ref[...], w_ref[...],
        (((1,), (1,)), ((), ())),               # contract E of x with E of w
        preferred_element_type=jnp.float32)     # f32 accumulation on the MXU
    o_ref[...] = (y + b_ref[...]).astype(o_ref.dtype)


def linear(x2d, w, b, *, compute_dtype=jnp.float32, tm=512):
    """x2d: (M, E), w: (D, E), b: (D,) -> (M, D) float32."""
    M, E = x2d.shape
    D = w.shape[0]
    TM = M if M <= tm else tm                   # TM == M (full) or multiple of 8
    grid_m = pl.cdiv(M, TM)

    xc = x2d.astype(compute_dtype)              # bf16 halves DMA bytes; no-op for f32
    wc = w.astype(compute_dtype)
    b2 = b.reshape(1, D).astype(jnp.float32)

    return pl.pallas_call(
        _linear_kernel,
        out_shape=jax.ShapeDtypeStruct((M, D), jnp.float32),
        grid_spec=pltpu.PrefetchScalarGridSpec(
            num_scalar_prefetch=0,
            grid=(grid_m,),
            in_specs=[
                pl.BlockSpec((TM, E), lambda i: (i, 0)),
                pl.BlockSpec((D, E), lambda i: (0, 0)),    # weight stays resident
                pl.BlockSpec((1, D), lambda i: (0, 0)),
            ],
            out_specs=pl.BlockSpec((TM, D), lambda i: (i, 0)),
        ),
        compiler_params=pltpu.CompilerParams(
            dimension_semantics=("parallel",)),
    )(xc, wc, b2)


# ---------------------------------------------------------------------------
# Kernel 2: scaled dot-product attention
#   grid over (batch, q-tile); all heads handled inside the kernel by slicing
#   the lane dimension, output written directly in (B, Nq, D) layout.
# ---------------------------------------------------------------------------
def _attention_kernel(q_ref, k_ref, v_ref, o_ref, *, num_heads, head_dim):
    # q_ref: (1, TQ, D)   (already scaled by 1/sqrt(head_dim))
    # k_ref, v_ref: (1, Nk, D),  o_ref: (1, TQ, D)
    q = q_ref[0]                                # (TQ, D)
    k = k_ref[0]                                # (Nk, D)
    v = v_ref[0]                                # (Nk, D)
    for h in range(num_heads):                  # static unroll (H is small)
        lo = h * head_dim
        qh = q[:, lo:lo + head_dim]             # (TQ, hd)
        kh = k[:, lo:lo + head_dim]             # (Nk, hd)
        vh = v[:, lo:lo + head_dim]             # (Nk, hd)
        s = jax.lax.dot_general(
            qh, kh, (((1,), (1,)), ((), ())),
            preferred_element_type=jnp.float32)             # (TQ, Nk), f32
        m = jnp.max(s, axis=-1, keepdims=True)
        p = jnp.exp(s - m)                                   # softmax math in f32
        denom = jnp.sum(p, axis=-1, keepdims=True)
        p = p * pl.reciprocal(denom, approx=True)            # EUP vrcp (free slot)
        oh = jnp.dot(p.astype(v.dtype), vh,
                     preferred_element_type=jnp.float32)     # (TQ, hd)
        o_ref[0, :, lo:lo + head_dim] = oh.astype(o_ref.dtype)


def sdpa_fused(q, k, v, num_heads, *, compute_dtype=jnp.float32, tq=256):
    """q: (B, Nq, D), k/v: (B, Nk, D) -> (B, Nq, D). Heads split in-kernel."""
    B, Nq, D = q.shape
    Nk = k.shape[1]
    head_dim = D // num_heads
    scale = 1.0 / math.sqrt(head_dim)           # PyTorch SDPA default scale
    TQ = Nq if Nq <= tq else tq

    qs = (q * scale).astype(compute_dtype)      # fold scale into q (Nq*D elems)
    kc = k.astype(compute_dtype)
    vc = v.astype(compute_dtype)

    kernel = functools.partial(_attention_kernel,
                               num_heads=num_heads, head_dim=head_dim)
    return pl.pallas_call(
        kernel,
        out_shape=jax.ShapeDtypeStruct((B, Nq, D), jnp.float32),
        grid_spec=pltpu.PrefetchScalarGridSpec(
            num_scalar_prefetch=0,
            grid=(B, pl.cdiv(Nq, TQ)),
            in_specs=[
                pl.BlockSpec((1, TQ, D), lambda b, t: (b, t, 0)),
                pl.BlockSpec((1, Nk, D), lambda b, t: (b, 0, 0)),
                pl.BlockSpec((1, Nk, D), lambda b, t: (b, 0, 0)),
            ],
            out_specs=pl.BlockSpec((1, TQ, D), lambda b, t: (b, t, 0)),
        ),
        compiler_params=pltpu.CompilerParams(
            dimension_semantics=("parallel", "parallel")),
    )(qs, kc, vc)


# ---------------------------------------------------------------------------
# Module-equivalent wrapper
# ---------------------------------------------------------------------------
def init_attention_params(key, embedding_dim, num_heads, downsample_rate=1):
    internal_dim = embedding_dim // downsample_rate
    assert internal_dim % num_heads == 0
    keys = jax.random.split(key, 8)

    def lin_init(kw, kb, out_f, in_f):
        # mimic nn.Linear default init: U(-1/sqrt(in_f), 1/sqrt(in_f))
        bound = 1.0 / math.sqrt(in_f)
        w = jax.random.uniform(kw, (out_f, in_f), jnp.float32, -bound, bound)
        b = jax.random.uniform(kb, (out_f,), jnp.float32, -bound, bound)
        return w, b

    return {
        "q_proj": lin_init(keys[0], keys[1], internal_dim, embedding_dim),
        "k_proj": lin_init(keys[2], keys[3], internal_dim, embedding_dim),
        "v_proj": lin_init(keys[4], keys[5], internal_dim, embedding_dim),
        "out_proj": lin_init(keys[6], keys[7], embedding_dim, internal_dim),
        "num_heads": num_heads,
        "internal_dim": internal_dim,
        "embedding_dim": embedding_dim,
    }


def attention_forward(params, q, k, v, *, compute_dtype=jnp.float32):
    """Matches Attention.forward (eval mode, dropout_p = 0). No transposes:
    projections stay token-major (B, N, D); heads are sliced inside the
    attention kernel; its output is already in (B, Nq, D) layout."""
    B, Nq, E = q.shape
    Nk = k.shape[1]
    H = params["num_heads"]
    D = params["internal_dim"]

    qp = linear(q.reshape(B * Nq, E), *params["q_proj"],
                compute_dtype=compute_dtype).reshape(B, Nq, D)
    kp = linear(k.reshape(B * Nk, E), *params["k_proj"],
                compute_dtype=compute_dtype).reshape(B, Nk, D)
    vp = linear(v.reshape(B * Nk, E), *params["v_proj"],
                compute_dtype=compute_dtype).reshape(B, Nk, D)

    # TODO(synk): when k and v come from the same tensor (or q==k==v), the
    # projections could be fused into a single wider matmul.
    out = sdpa_fused(qp, kp, vp, H, compute_dtype=compute_dtype)   # (B, Nq, D)

    out = linear(out.reshape(B * Nq, D), *params["out_proj"],
                 compute_dtype=compute_dtype).reshape(B, Nq, E)
    return out


def attention_reference(params, q, k, v):
    """Pure-JAX f32 reference for correctness check."""
    B, Nq, E = q.shape
    Nk = k.shape[1]
    H = params["num_heads"]
    D = params["internal_dim"]
    hd = D // H

    def lin(x, wb):
        w, b = wb
        return x @ w.T + b

    qp = lin(q, params["q_proj"]).reshape(B, Nq, H, hd).transpose(0, 2, 1, 3)
    kp = lin(k, params["k_proj"]).reshape(B, Nk, H, hd).transpose(0, 2, 1, 3)
    vp = lin(v, params["v_proj"]).reshape(B, Nk, H, hd).transpose(0, 2, 1, 3)
    s = jnp.einsum("bhqd,bhkd->bhqk", qp, kp) / math.sqrt(hd)
    p = jax.nn.softmax(s, axis=-1)
    o = jnp.einsum("bhqk,bhkd->bhqd", p, vp)
    o = o.transpose(0, 2, 1, 3).reshape(B, Nq, D)
    return lin(o, params["out_proj"])


if __name__ == "__main__":
    # small shapes: batch=2, seq_q=8, seq_kv=16, embedding_dim=32, heads=4
    B, Nq, Nk, E, H = 2, 8, 16, 32, 4

    key = jax.random.PRNGKey(0)
    kq, kk, kv, kp = jax.random.split(key, 4)
    q = jax.random.normal(kq, (B, Nq, E), jnp.float32)
    k = jax.random.normal(kk, (B, Nk, E), jnp.float32)
    v = jax.random.normal(kv, (B, Nk, E), jnp.float32)

    params = init_attention_params(kp, embedding_dim=E, num_heads=H,
                                   downsample_rate=1)

    ref = attention_reference(params, q, k, v)

    # f32 operand path (exact module semantics; approx reciprocal in softmax)
    out_f32 = jax.block_until_ready(
        attention_forward(params, q, k, v, compute_dtype=jnp.float32))
    assert out_f32.shape == (B, Nq, E)
    assert jnp.allclose(out_f32, ref, atol=5e-3, rtol=5e-3), "f32 mismatch vs reference"

    # bf16 matmul-operand path (perf-recommended for v5e/v6e/v7x MXUs)
    out_bf16 = jax.block_until_ready(
        attention_forward(params, q, k, v, compute_dtype=jnp.bfloat16))
    assert out_bf16.shape == (B, Nq, E)
    assert jnp.allclose(out_bf16, ref, atol=5e-2, rtol=5e-2), "bf16 mismatch vs reference"

    print("KERNEL_OK")
</pallas_src>

<mosaic_0001>
module attributes {stable_mosaic.version = 11 : i64} {
  func.func @_linear_kernel(%arg0: i32, %arg1: memref<16x32xf32, #tpu.memory_space<vmem>>, %arg2: memref<32x32xf32, #tpu.memory_space<vmem>>, %arg3: memref<1x32xf32, #tpu.memory_space<vmem>>, %arg4: memref<16x32xf32, #tpu.memory_space<vmem>>) attributes {dimension_semantics = [#tpu.dimension_semantics<parallel>], iteration_bounds = array<i64: 1>, scalar_prefetch = 0 : i64, scratch_operands = 0 : i64, tpu.core_type = #tpu.core_type<tc>, window_params = [{transform_indices = @transform_0, window_bounds = array<i64: 16, 32>}, {pipeline_mode = #tpu.pipeline_mode<synchronous>, transform_indices = @transform_1, window_bounds = array<i64: 32, 32>}, {pipeline_mode = #tpu.pipeline_mode<synchronous>, transform_indices = @transform_2, window_bounds = array<i64: 1, 32>}, {transform_indices = @transform_3, window_bounds = array<i64: 16, 32>}]} {
    %c0 = arith.constant 0 : index
    %c0_0 = arith.constant 0 : index
    %0 = vector.load %arg1[%c0, %c0_0] : memref<16x32xf32, #tpu.memory_space<vmem>>, vector<16x32xf32>
    %c0_1 = arith.constant 0 : index
    %c0_2 = arith.constant 0 : index
    %1 = vector.load %arg2[%c0_1, %c0_2] : memref<32x32xf32, #tpu.memory_space<vmem>>, vector<32x32xf32>
    %cst = arith.constant dense<0.000000e+00> : vector<16x32xf32>
    %2 = tpu.matmul %0, %1, %cst {dimension_numbers = #tpu.dot_dimension_numbers<[1], [1], [0], [0], [0, 0, 1, 0], [], []>} : vector<16x32xf32>, vector<32x32xf32>, vector<16x32xf32> -> vector<16x32xf32>
    %c0_3 = arith.constant 0 : index
    %c0_4 = arith.constant 0 : index
    %3 = vector.load %arg3[%c0_3, %c0_4] : memref<1x32xf32, #tpu.memory_space<vmem>>, vector<1x32xf32>
    %4 = vector.broadcast %3 : vector<1x32xf32> to vector<16x32xf32>
    %5 = arith.addf %2, %4 : vector<16x32xf32>
    %c0_5 = arith.constant 0 : index
    %c0_6 = arith.constant 0 : index
    %6 = vector.load %arg4[%c0_5, %c0_6] : memref<16x32xf32, #tpu.memory_space<vmem>>, vector<16x32xf32>
    tpu.vector_store %arg4[%c0_5, %c0_6], %5 {strides = array<i32>} : memref<16x32xf32, #tpu.memory_space<vmem>>, vector<16x32xf32>,
    return
  }
  func.func @transform_0(%arg0: i32) -> (i32, i32) {
    %c0_i32 = arith.constant 0 : i32
    %c0_i32_0 = arith.constant 0 : i32
    return %arg0, %c0_i32 : i32, i32
  }
  func.func @transform_1(%arg0: i32) -> (i32, i32) {
    %c0_i32 = arith.constant 0 : i32
    %c0_i32_0 = arith.constant 0 : i32
    %c0_i32_1 = arith.constant 0 : i32
    return %c0_i32, %c0_i32_0 : i32, i32
  }
  func.func @transform_2(%arg0: i32) -> (i32, i32) {
    %c0_i32 = arith.constant 0 : i32
    %c0_i32_0 = arith.constant 0 : i32
    %c0_i32_1 = arith.constant 0 : i32
    return %c0_i32, %c0_i32_0 : i32, i32
  }
  func.func @transform_3(%arg0: i32) -> (i32, i32) {
    %c0_i32 = arith.constant 0 : i32
    %c0_i32_0 = arith.constant 0 : i32
    return %arg0, %c0_i32 : i32, i32
  }
}

</mosaic_0001>

<llo_original>
// kernel: tpu_custom_call.1
$region0: #{tpu_custom_call.1}
  #allocation0 [shape = 'u32[]', space=smem, size = 0x4, offset = 0x4, fixed_abs, tag = 'smem constant byte address 0x4 - core index']
  #allocation1 [shape = 'u32[144,128]{1,0:T(1,128)}', space=vmem, size = 0x12000, scoped, tag = 'internal scratch']
  %s0 = inlined_call_operand.hbm [shape: f32[16,32], index: 0, kind: input, shape index: {}]
  %s1 = inlined_call_operand.hbm [shape: f32[32,32], index: 1, kind: input, shape index: {}]
  %s2 = inlined_call_operand.vmem [shape: f32[1,32], index: 2, kind: input, shape index: {}]
  %s3 = inlined_call_operand.hbm [shape: f32[16,32], index: 3, kind: output, shape index: {}]
  %s4 = sld [smem:[#allocation0]]
  $region30: #{tpu_custom_call.1} parent=0
    _
  %s6 = ssub.s32 1, %s4
  %s7 = scalar_select 0, %s6, %s4
  $region1: #{tpu_custom_call.1} parent=0
    #allocation2 [shape = 'u8[8192]{0}', space=vmem, size = 0x2000, scoped, tag = 'input window, operand 0, single buffered']
    #allocation3 [shape = 's32[1]{0}', space=sflag, size = 0x4, scoped, tag = 'scoped memory for tpu_custom_call.1']
    #allocation4 [shape = 's32[1]{0}', space=sflag, size = 0x4, scoped, tag = 'scoped memory for tpu_custom_call.1']
    #allocation5 [shape = 'u8[16384]{0}', space=vmem, size = 0x4000, scoped, tag = 'input window, operand 1, single buffered']
    #allocation6 [shape = 's32[1]{0}', space=sflag, size = 0x4, scoped, tag = 'scoped memory for tpu_custom_call.1']
    #allocation7 [shape = 'u8[8192]{0}', space=vmem, size = 0x2000, scoped, tag = 'output window, operand 0, single buffered']
    %8 = vsyncpa [#allocation3], 0
    %9 = vsyncpa [#allocation6], 0
    %10 = vsyncpa [#allocation4], 0
    // Predicated region
    $region2: #{tpu_custom_call.1} parent=1 // pred_check
      _
    $region3: #{tpu_custom_call.1} parent=1 // pred_check_branch
      %12 = sbr.rel (0) target = $region5
    $region4: #{tpu_custom_call.1} parent=1 // pred_region
      %s14 = ssub.s32 256, 256
      %15 = vsyncadd [#allocation3], %s14
      %s16 = sshll.u32 [#allocation2], 4
      %s17 = int_to_ptr.vmem [resolvable:$true] %s16
      %22 = dma.hbm_to_vmem [thread:$0]  %s0, 256, %s17, [#allocation3], 128, 128, 8
    $region5: #{tpu_custom_call.1} parent=1 // pred_fallthru
      _
    // Predicated region
    $region6: #{tpu_custom_call.1} parent=1 // pred_check
      _
    $region7: #{tpu_custom_call.1} parent=1 // pred_check_branch
      %24 = sbr.rel (0) target = $region9
    $region8: #{tpu_custom_call.1} parent=1 // pred_region
      %s26 = ssub.s32 512, 512
      %27 = vsyncadd [#allocation6], %s26
      %s28 = sshll.u32 [#allocation5], 4
      %s29 = int_to_ptr.vmem [resolvable:$true] %s28
      %34 = dma.hbm_to_vmem [thread:$0]  %s1, 512, %s29, [#allocation6], 128, 128, 8
    $region9: #{tpu_custom_call.1} parent=1 // pred_fallthru
      _
    // Predicated region
    $region10: #{tpu_custom_call.1} parent=1 // pred_check
      _
    $region11: #{tpu_custom_call.1} parent=1 // pred_check_branch
      %36 = sbr.rel (0) target = $region13
    $region12: #{tpu_custom_call.1} parent=1 // pred_region
      _
    $region13: #{tpu_custom_call.1} parent=1 // pred_fallthru
      _
    // Predicated region
    $region14: #{tpu_custom_call.1} parent=1 // pred_check
      _
    $region15: #{tpu_custom_call.1} parent=1 // pred_check_branch
      %38 = sbr.rel (0) target = $region17
    $region16: #{tpu_custom_call.1} parent=1 // pred_region
      %39 = dma.done [#allocation3], 256
    $region17: #{tpu_custom_call.1} parent=1 // pred_fallthru
      _
    // Predicated region
    $region18: #{tpu_custom_call.1} parent=1 // pred_check
      _
    $region19: #{tpu_custom_call.1} parent=1 // pred_check_branch
      %41 = sbr.rel (0) target = $region21
    $region20: #{tpu_custom_call.1} parent=1 // pred_region
      %42 = dma.done [#allocation6], 512
    $region21: #{tpu_custom_call.1} parent=1 // pred_fallthru
      _
    %v43 = vld [vmem:[#allocation2] sm:$0xff]
    %v44 = vld [vmem:[#allocation2 + $0x8] sm:$0xff]
    %v45 = vld [vmem:[#allocation5] sm:$0xff]
    %v46 = vld [vmem:[#allocation5 + $0x8] sm:$0xff]
    %v47 = vld [vmem:[#allocation5 + $0x10] sm:$0xff]
    %v48 = vld [vmem:[#allocation5 + $0x18] sm:$0xff]
    %v49 = vld [vmem:[%s2] sm:$0x1]
    %v51 = vlaneseq
    %v52 = vshrl.u32 %v51, 7
    %v53 = vsub.s32 0, %v52
    %v54 = vrot.slane %v49, %v53
    %vm56 = vcmask 261120
    %v58 = vsel %vm56, %v43, 0
    %v61 = vsel %vm56, %v44, 0
    %v64 = vsel %vm56, %v45, 0
    %v67 = vsel %vm56, %v46, 0
    %v70 = vsel %vm56, %v47, 0
    %v73 = vsel %vm56, %v48, 0
    %75 = vmatprep.subr.mxu0 0.0
    %76 = vmatpush1.xpose.msra.mxu0 %v64
    %77 = vmatprep.subr.mxu0 0.0
    %78 = vmatpush1.xpose.msra.mxu0 %v67
    %79 = vmatprep.subr.mxu0 0.0
    %80 = vmatpush1.xpose.msra.mxu0 %v70
    %81 = vmatprep.subr.mxu0 0.0
    %82 = vmatpush1.xpose.msra.mxu0 %v73
    %83 = vmatprep.subr.mxu0 0.0
    %84 = vmatpush1.xpose.msra.mxu0 0.0
    %85 = vmatprep.subr.mxu0 0.0
    %86 = vmatpush1.xpose.msra.mxu0 0.0
    %87 = vmatprep.subr.mxu0 0.0
    %88 = vmatpush1.xpose.msra.mxu0 0.0
    %89 = vmatprep.subr.mxu0 0.0
    %90 = vmatpush1.xpose.msra.mxu0 0.0
    %91 = vmatprep.subr.mxu0 0.0
    %92 = vmatpush1.xpose.msra.mxu0 0.0
    %93 = vmatprep.subr.mxu0 0.0
    %94 = vmatpush1.xpose.msra.mxu0 0.0
    %95 = vmatprep.subr.mxu0 0.0
    %96 = vmatpush1.xpose.msra.mxu0 0.0
    %97 = vmatprep.subr.mxu0 0.0
    %98 = vmatpush1.xpose.msra.mxu0 0.0
    %99 = vmatprep.subr.mxu0 0.0
    %100 = vmatpush1.xpose.msra.mxu0 0.0
    %101 = vmatprep.subr.mxu0 0.0
    %102 = vmatpush1.xpose.msra.mxu0 0.0
    %103 = vmatprep.subr.mxu0 0.0
    %104 = vmatpush1.xpose.msra.mxu0 0.0
    %105 = vmatprep.subr.mxu0 0.0
    %106 = vmatpush1.xpose.msra.mxu0 0.0
    %107 = vmatprep.subr.mxu0 0.0
    %108 = vmatpush1.xpose.msra.mxu0 0.0
    %109 = vmatprep.subr.mxu0 0.0
    %110 = vmatpush1.xpose.msra.mxu0 0.0
    %111 = vmatprep.subr.mxu0 0.0
    %112 = vmatpush1.xpose.msra.mxu0 0.0
    %113 = vmatprep.subr.mxu0 0.0
    %114 = vmatpush1.xpose.msra.mxu0 0.0
    %115 = vmatprep.subr.mxu0 0.0
    %116 = vmatpush1.xpose.msra.mxu0 0.0
    %117 = vmatprep.subr.mxu0 0.0
    %118 = vmatpush1.xpose.msra.mxu0 0.0
    %119 = vmatprep.subr.mxu0 0.0
    %120 = vmatpush1.xpose.msra.mxu0 0.0
    %121 = vmatprep.subr.mxu0 0.0
    %122 = vmatpush1.xpose.msra.mxu0 0.0
    %123 = vmatprep.subr.mxu0 0.0
    %124 = vmatpush1.xpose.msra.mxu0 0.0
    %125 = vmatprep.subr.mxu0 0.0
    %126 = vmatpush1.xpose.msra.mxu0 0.0
    %127 = vmatprep.subr.mxu0 0.0
    %128 = vmatpush1.xpose.msra.mxu0 0.0
    %129 = vmatprep.subr.mxu0 0.0
    %130 = vmatpush1.xpose.msra.mxu0 0.0
    %131 = vmatprep.subr.mxu0 0.0
    %132 = vmatpush1.xpose.msra.mxu0 0.0
    %133 = vmatprep.subr.mxu0 0.0
    %134 = vmatpush1.xpose.msra.mxu0 0.0
    %135 = vmatprep.subr.mxu0 0.0
    %136 = vmatpush1.xpose.msra.mxu0 0.0
    %137 = vmatprep.subr.mxu0 0.0
    %138 = vmatpush1.xpose.msra.mxu0 0.0
    %139 = vmatprep.mubr.f32.mxu0 0.0
    %140 = vmatmul.mubr.f32.gmra.mrb[0].mxu0 %v58
    %v141 = vpop.f32.mrb[0].mxu0
    %v142 = vadd.f32 %v54, %v141
    %v143 = vpop.f32.mrb[0].mxu0
    %144 = vmatprep.mubr.f32.mxu0 0.0
    %145 = vmatmul.mubr.f32.gmra.mrb[0].mxu0 %v61
    %v146 = vpop.f32.mrb[0].mxu0
    %v147 = vadd.f32 %v54, %v146
    %v148 = vpop.f32.mrb[0].mxu0
    %149 = vdwg.mxu0
    %150 = vst.msk [vmem:[#allocation7] sm:$0xff] %vm56, %v142
    %151 = vst.msk [vmem:[#allocation7 + $0x8] sm:$0xff] %vm56, %v147
    // Predicated region
    $region22: #{tpu_custom_call.1} parent=1 // pred_check
      _
    $region23: #{tpu_custom_call.1} parent=1 // pred_check_branch
      %153 = sbr.rel (0) target = $region25
    $region24: #{tpu_custom_call.1} parent=1 // pred_region
      %s155 = ssub.s32 256, 256
      %156 = vsyncadd [#allocation4], %s155
      %s157 = sshll.u32 [#allocation7], 4
      %s158 = int_to_ptr.vmem [resolvable:$true] %s157
      %163 = dma.vmem_to_hbm [thread:$0]  %s158, 256, %s3, [#allocation4], 128, 128, 8
    $region25: #{tpu_custom_call.1} parent=1 // pred_fallthru
      _
    // Predicated region
    $region26: #{tpu_custom_call.1} parent=1 // pred_check
      _
    $region27: #{tpu_custom_call.1} parent=1 // pred_check_branch
      %165 = sbr.rel (0) target = $region29
    $region28: #{tpu_custom_call.1} parent=1 // pred_region
      %166 = dma.done [#allocation4], 256
    $region29: #{tpu_custom_call.1} parent=1 // pred_fallthru
      _
    %167 = vsyncpa [#allocation3], 1
    %168 = vsyncpa [#allocation6], 1
    %169 = vsyncpa [#allocation4], 1

</llo_original>
